<compile_context>
chip_gen: v5e
topology: v5e:2x2
jax: 0.10.0
libtpu: 0.0.40
codegen_flags: <defaults>
</compile_context>

<pallas_src>
import functools

import jax
import jax.numpy as jnp
from jax.experimental import pallas as pl
from jax.experimental.pallas import tpu as pltpu


def logreg_kernel(x_ref, w_ref, b_ref, o_ref):
    """One batch tile.

    x_ref: (TB, D) VMEM  -- streamed / double-buffered by Pallas
    w_ref: (1, D)  VMEM  -- loop-invariant, resident across the grid
    b_ref: (1, 1)  SMEM  -- scalar bias
    o_ref: (1, TB) VMEM  -- lane-dense output row for this tile
    """
    x = x_ref[...].astype(jnp.float32)
    w = w_ref[...].astype(jnp.float32)           # sublane-broadcast over the tile
    # VPU multiply + cross-lane (XLU) reduce; f32 accumulation. Avoids the
    # <1%-utilized N=1 MXU matmul and the awkward (D, 1) column weight layout.
    z = jnp.sum(x * w, axis=-1) + b_ref[0, 0]    # (TB,)
    p = jax.nn.sigmoid(z)                        # EUP transcendental
    o_ref[...] = p[None, :].astype(o_ref.dtype)  # lane-dense (1, TB) store


def _pick_block_rows(batch, features, itemsize,
                     vmem_budget_bytes=48 * 1024 * 1024, max_rows=1024):
    """Largest batch tile whose double-buffered x DMA fits the VMEM budget.

    The budget is conservative enough for v7x (64 MiB VMEM, 32 MiB default
    scoped limit); v5e/v6e (128 MiB) simply get the same safe tile size.
    """
    rows = vmem_budget_bytes // (2 * max(features, 1) * itemsize)
    rows = max(8, min(max_rows, (rows // 8) * 8))
    if batch <= rows:
        return batch  # single full block: no padding needed, always layout-legal
    return rows


@functools.partial(jax.jit, static_argnames=("block_rows",))
def logistic_regression_forward(x, weight, bias, *, block_rows=None):
    """x: (B, D) f32, weight: (1, D) f32 (torch nn.Linear layout), bias: (1,) f32."""
    B, D = x.shape
    itemsize = jnp.dtype(x.dtype).itemsize
    TB = block_rows if block_rows is not None else _pick_block_rows(B, D, itemsize)

    # Pad the batch to a multiple of TB; padded rows are dropped after the call.
    G = pl.cdiv(B, TB)
    B_pad = G * TB
    if B_pad != B:
        x = jnp.pad(x, ((0, B_pad - B), (0, 0)))

    b_smem = bias.reshape(1, 1)

    cost = pl.CostEstimate(
        flops=2 * B_pad * D,
        transcendentals=B_pad,  # one sigmoid per row
        bytes_accessed=itemsize * (B_pad * D + D + B_pad) + 4,
    )

    out_rows = pl.pallas_call(
        logreg_kernel,
        out_shape=jax.ShapeDtypeStruct((G, TB), x.dtype),
        grid=(G,),
        in_specs=[
            # x: streamed batch tiles (double-buffered by Pallas).
            # Optional further tweak: pipeline_mode=pl.Buffered(3) -- sweep 2 vs 3.
            pl.BlockSpec((TB, D), lambda i: (i, 0)),
            # weight: same block every step -> DMA'd once, stays resident in VMEM.
            pl.BlockSpec((1, D), lambda i: (0, 0)),
            # bias: whole (1, 1) scalar in SMEM.
            pl.BlockSpec(memory_space=pltpu.SMEM),
        ],
        out_specs=pl.BlockSpec((1, TB), lambda i: (i, 0)),
        compiler_params=pltpu.CompilerParams(
            # Batch tiles are independent -> shard across TensorCores (v7x has 2).
            dimension_semantics=("parallel",),
        ),
        cost_estimate=cost,
    )(x, weight, b_smem)

    # (G, TB) lane-dense rows -> (B, 1) column, dropping the padded tail.
    return out_rows.reshape(B_pad, 1)[:B]


if __name__ == "__main__":
    key = jax.random.PRNGKey(0)
    k_x, k_w, k_b = jax.random.split(key, 3)

    batch = 8
    input_size = 32

    # Deterministic parameter init (mimics torch.nn.Linear U(-1/sqrt(D), 1/sqrt(D))).
    bound = 1.0 / (input_size ** 0.5)
    weight = jax.random.uniform(k_w, (1, input_size), jnp.float32, -bound, bound)
    bias = jax.random.uniform(k_b, (1,), jnp.float32, -bound, bound)

    x = jax.random.normal(k_x, (batch, input_size), jnp.float32)

    # Single-tile run (TB == B, grid of 1).
    out = logistic_regression_forward(x, weight, bias)
    out = jax.block_until_ready(out)

    ref = jax.nn.sigmoid(x @ weight.T + bias)
    assert out.shape == (batch, 1)
    assert jnp.allclose(out, ref, atol=1e-5, rtol=1e-5)

    # Multi-tile run exercising the grid, resident weight, and ragged-tail padding
    # (B=20 with TB=8 -> 3 grid steps, 4 padded rows dropped).
    x2 = jax.random.normal(jax.random.PRNGKey(1), (20, input_size), jnp.float32)
    out2 = jax.block_until_ready(
        logistic_regression_forward(x2, weight, bias, block_rows=8))
    ref2 = jax.nn.sigmoid(x2 @ weight.T + bias)
    assert out2.shape == (20, 1)
    assert jnp.allclose(out2, ref2, atol=1e-5, rtol=1e-5)

    print("KERNEL_OK")
</pallas_src>

<mosaic_0001>
module attributes {stable_mosaic.version = 11 : i64} {
  func.func @logreg_kernel(%arg0: i32, %arg1: memref<8x32xf32, #tpu.memory_space<vmem>>, %arg2: memref<1x32xf32, #tpu.memory_space<vmem>>, %arg3: memref<1x1xf32, #tpu.memory_space<smem>>, %arg4: memref<1x8xf32, #tpu.memory_space<vmem>>) attributes {dimension_semantics = [#tpu.dimension_semantics<parallel>], iteration_bounds = array<i64: 1>, scalar_prefetch = 0 : i64, scratch_operands = 0 : i64, tpu.core_type = #tpu.core_type<tc>, window_params = [{transform_indices = @transform_0, window_bounds = array<i64: 8, 32>}, {pipeline_mode = #tpu.pipeline_mode<synchronous>, transform_indices = @transform_1, window_bounds = array<i64: 1, 32>}, {transform_indices = @transform_2, window_bounds = array<i64: 1, 1>}, {transform_indices = @transform_3, window_bounds = array<i64: 1, 8>}]} {
    %c0 = arith.constant 0 : index
    %c0_0 = arith.constant 0 : index
    %0 = vector.load %arg1[%c0, %c0_0] : memref<8x32xf32, #tpu.memory_space<vmem>>, vector<8x32xf32>
    %c0_1 = arith.constant 0 : index
    %c0_2 = arith.constant 0 : index
    %1 = vector.load %arg2[%c0_1, %c0_2] : memref<1x32xf32, #tpu.memory_space<vmem>>, vector<1x32xf32>
    %2 = vector.broadcast %1 : vector<1x32xf32> to vector<8x32xf32>
    %3 = arith.mulf %0, %2 : vector<8x32xf32>
    %cst = arith.constant dense<0.000000e+00> : vector<8xf32>
    %4 = vector.multi_reduction <add>, %3, %cst [1] : vector<8x32xf32> to vector<8xf32>
    %c0_3 = arith.constant 0 : index
    %c0_4 = arith.constant 0 : index
    %5 = memref.load %arg3[%c0_3, %c0_4] : memref<1x1xf32, #tpu.memory_space<smem>>
    %6 = vector.broadcast %5 : f32 to vector<8xf32>
    %7 = arith.addf %4, %6 : vector<8xf32>
    %8 = arith.negf %7 : vector<8xf32>
    %9 = math.exp %8 : vector<8xf32>
    %cst_5 = arith.constant 1.000000e+00 : f32
    %10 = vector.broadcast %cst_5 : f32 to vector<8xf32>
    %11 = arith.addf %10, %9 : vector<8xf32>
    %12 = arith.divf %10, %11 : vector<8xf32>
    %13 = vector.shape_cast %12 : vector<8xf32> to vector<1x8xf32>
    %c0_6 = arith.constant 0 : index
    %c0_7 = arith.constant 0 : index
    %14 = vector.load %arg4[%c0_6, %c0_7] : memref<1x8xf32, #tpu.memory_space<vmem>>, vector<1x8xf32>
    tpu.vector_store %arg4[%c0_6, %c0_7], %13 {strides = array<i32>} : memref<1x8xf32, #tpu.memory_space<vmem>>, vector<1x8xf32>,
    return
  }
  func.func @transform_0(%arg0: i32) -> (i32, i32) {
    %c0_i32 = arith.constant 0 : i32
    %c0_i32_0 = arith.constant 0 : i32
    return %arg0, %c0_i32 : i32, i32
  }
  func.func @transform_1(%arg0: i32) -> (i32, i32) {
    %c0_i32 = arith.constant 0 : i32
    %c0_i32_0 = arith.constant 0 : i32
    %c0_i32_1 = arith.constant 0 : i32
    return %c0_i32, %c0_i32_0 : i32, i32
  }
  func.func @transform_2(%arg0: i32) -> (i32, i32) {
    %c0_i32 = arith.constant 0 : i32
    %c0_i32_0 = arith.constant 0 : i32
    %c0_i32_1 = arith.constant 0 : i32
    return %c0_i32, %c0_i32_0 : i32, i32
  }
  func.func @transform_3(%arg0: i32) -> (i32, i32) {
    %c0_i32 = arith.constant 0 : i32
    %c0_i32_0 = arith.constant 0 : i32
    return %arg0, %c0_i32 : i32, i32
  }
}

</mosaic_0001>

<llo_original>
// kernel: logistic_regression_forward.1
$region0: #{logistic_regression_forward.1}
  #allocation0 [shape = 'u32[]', space=smem, size = 0x4, offset = 0x4, fixed_abs, tag = 'smem constant byte address 0x4 - core index']
  #allocation1 [shape = 'u32[72,128]{1,0:T(1,128)}', space=vmem, size = 0x9000, scoped, tag = 'internal scratch']
  #allocation2 [shape = 'f32[1,1]{1,0:T(1,128)S(6)}', space=smem, size = 0x200, scoped, tag = 'scoped memory for logistic_regression_forward.1']
  %s0 = inlined_call_operand.hbm [shape: f32[8,32], index: 0, kind: input, shape index: {}]
  %s1 = inlined_call_operand.vmem [shape: f32[1,32], index: 1, kind: input, shape index: {}]
  %s2 = inlined_call_operand.<no memory space> [shape: f32[1,1], index: 2, kind: input, shape index: {}]
  %s3 = inlined_call_operand.hbm [shape: f32[1,8], index: 3, kind: output, shape index: {}]
  %s4 = sld [smem:[#allocation0]]
  $region26: #{logistic_regression_forward.1} parent=0
    _
  %s6 = ssub.s32 1, %s4
  %s7 = scalar_select 0, %s6, %s4
  %8 = sst [smem:[#allocation2]] %s2
  $region1: #{logistic_regression_forward.1} parent=0
    #allocation3 [shape = 'u8[4096]{0}', space=vmem, size = 0x1000, scoped, tag = 'input window, operand 0, single buffered']
    #allocation4 [shape = 's32[1]{0}', space=sflag, size = 0x4, scoped, tag = 'scoped memory for logistic_regression_forward.1']
    #allocation5 [shape = 's32[1]{0}', space=sflag, size = 0x4, scoped, tag = 'scoped memory for logistic_regression_forward.1']
    #allocation6 [shape = 'u8[512]{0}', space=vmem, size = 0x400, scoped, tag = 'output window, operand 0, single buffered']
    %9 = vsyncpa [#allocation4], 0
    %10 = vsyncpa [#allocation5], 0
    // Predicated region
    $region2: #{logistic_regression_forward.1} parent=1 // pred_check
      _
    $region3: #{logistic_regression_forward.1} parent=1 // pred_check_branch
      %12 = sbr.rel (0) target = $region5
    $region4: #{logistic_regression_forward.1} parent=1 // pred_region
      %14 = vsyncadd [#allocation4], 0
      %s16 = sshll.u32 %s0, 4
      %s17 = int_to_ptr.hbm [resolvable:$true] %s16
      %s18 = sshll.u32 [#allocation3], 4
      %s19 = int_to_ptr.vmem [resolvable:$true] %s18
      %21 = dma.hbm_to_vmem [thread:$0]  %s17, 128, %s19, [#allocation4]
    $region5: #{logistic_regression_forward.1} parent=1 // pred_fallthru
      _
    // Predicated region
    $region6: #{logistic_regression_forward.1} parent=1 // pred_check
      _
    $region7: #{logistic_regression_forward.1} parent=1 // pred_check_branch
      %23 = sbr.rel (0) target = $region9
    $region8: #{logistic_regression_forward.1} parent=1 // pred_region
      _
    $region9: #{logistic_regression_forward.1} parent=1 // pred_fallthru
      _
    // Predicated region
    $region10: #{logistic_regression_forward.1} parent=1 // pred_check
      _
    $region11: #{logistic_regression_forward.1} parent=1 // pred_check_branch
      %25 = sbr.rel (0) target = $region13
    $region12: #{logistic_regression_forward.1} parent=1 // pred_region
      _
    $region13: #{logistic_regression_forward.1} parent=1 // pred_fallthru
      _
    // Predicated region
    $region14: #{logistic_regression_forward.1} parent=1 // pred_check
      _
    $region15: #{logistic_regression_forward.1} parent=1 // pred_check_branch
      %27 = sbr.rel (0) target = $region17
    $region16: #{logistic_regression_forward.1} parent=1 // pred_region
      %29 = dma.done [#allocation4], 128
    $region17: #{logistic_regression_forward.1} parent=1 // pred_fallthru
      _
    %v30 = vld [vmem:[#allocation3] sm:$0xff]
    %v31 = vld [vmem:[%s1] sm:$0x1]
    %v33 = vperm.slane %v31, 0
    %v35 = vmul.f32 %v30, %v33
    %vm36 = vcmask 261120
    %v37 = vsel %vm36, %v35, 0.0
    %38 = vadd.xlane.f32.xlu0 %v37
    %v39 = vpop.xlane.xlu0 %38
    %s40 = sld [smem:[#allocation2]]
    %v41 = vstv %s40
    %v42 = vadd.f32 %v39, %v41
    %v43 = vxor.u32 %v42, 2147483648
    %v44 = vmul.f32 %v43, 1.442695
    %v45 = vpow.pop %v44
    %v46 = vadd.f32 %v45, 1.0
    %v47 = vrcp.pop %v46
    %v48 = vmul.f32 %v46, %v47
    %v49 = vsub.f32 1.0, %v48
    %v50 = vmul.f32 %v47, %v49
    %v51 = vadd.f32 %v47, %v50
    %vm52 = vweird.f32 %v46
    %vm53 = vweird.f32 %v47
    %vm54 = vmor %vm52, %vm53
    %v55 = vsel %vm54, %v47, %v51
    %v56 = vand.u32 2147483647, %v46
    %vm57 = vcmp.eq.f32.partialorder %v56, 8.507059e+37
    %v58 = vand.u32 %v46, 2147483648
    %v59 = vor.u32 1.1754944e-38, %v58
    %v60 = vsel %vm57, %v59, %v55
    %v61 = vmul.f32 1.0, %v60
    %v63 = vlaneseq
    %v64 = vand.u32 %v63, 127
    %v65 = vperm.slane %v61, %v64
    %vm67 = vcmask 57344
    %68 = vst.msk [vmem:[#allocation6] sm:$0x1] %vm67, %v65
    // Predicated region
    $region18: #{logistic_regression_forward.1} parent=1 // pred_check
      _
    $region19: #{logistic_regression_forward.1} parent=1 // pred_check_branch
      %70 = sbr.rel (0) target = $region21
    $region20: #{logistic_regression_forward.1} parent=1 // pred_region
      %72 = vsyncadd [#allocation5], 0
      %s74 = sshll.u32 [#allocation6], 4
      %s75 = int_to_ptr.vmem [resolvable:$true] %s74
      %s76 = sshll.u32 %s3, 4
      %s77 = int_to_ptr.hbm [resolvable:$true] %s76
      %79 = dma.vmem_to_hbm [thread:$0]  %s75, 16, %s77, [#allocation5]
    $region21: #{logistic_regression_forward.1} parent=1 // pred_fallthru
      _
    // Predicated region
    $region22: #{logistic_regression_forward.1} parent=1 // pred_check
      _
    $region23: #{logistic_regression_forward.1} parent=1 // pred_check_branch
      %81 = sbr.rel (0) target = $region25
    $region24: #{logistic_regression_forward.1} parent=1 // pred_region
      %83 = dma.done [#allocation5], 16
    $region25: #{logistic_regression_forward.1} parent=1 // pred_fallthru
      _
    %84 = vsyncpa [#allocation4], 1
    %85 = vsyncpa [#allocation5], 1

</llo_original>
